<compile_context>
chip_gen: v6e
topology: v6e:2x2x1
jax: 0.10.0
libtpu: 0.0.40
codegen_flags: <defaults>
</compile_context>

<pallas_src>
import jax
import jax.numpy as jnp
import numpy as np
from jax import lax
from jax.experimental import pallas as pl
from jax.experimental.pallas import tpu as pltpu


def basic_block_kernel(x_ref, w1_ref, b1_ref, w2_ref, b2_ref, o_ref):
    # x_ref: (bt, L, Cp) bf16 (channels zero-padded to Cp, lane-dense).
    # w*_ref: (3, Cp, Cp) bf16 (BN scale folded in, tap k=0 <-> x[l-1]).
    # b*_ref: (1, Cp) f32 (BN shift).
    bt, L, Cp = x_ref.shape
    x = x_ref[...]                                              # bf16
    zrow = jnp.zeros((bt, 1, Cp), jnp.bfloat16)

    # --- conv1: three shifted taps -> three accumulating MXU matmuls (f32 accumulation) ---
    xm1 = jnp.concatenate([zrow, x[:, :L - 1, :]], axis=1).reshape(bt * L, Cp)   # x[l-1]
    x0 = x.reshape(bt * L, Cp)                                                   # x[l] (also identity)
    xp1 = jnp.concatenate([x[:, 1:, :], zrow], axis=1).reshape(bt * L, Cp)       # x[l+1]

    h = jnp.dot(xm1, w1_ref[0], preferred_element_type=jnp.float32)
    h += jnp.dot(x0, w1_ref[1], preferred_element_type=jnp.float32)
    h += jnp.dot(xp1, w1_ref[2], preferred_element_type=jnp.float32)
    h = jnp.maximum(h + b1_ref[...], 0.0)                       # bias (BN shift) + ReLU, f32

    # --- conv2 on bf16 h with the same shifted-tap scheme -------------------------------
    hb = h.astype(jnp.bfloat16).reshape(bt, L, Cp)
    hm1 = jnp.concatenate([zrow, hb[:, :L - 1, :]], axis=1).reshape(bt * L, Cp)
    hp1 = jnp.concatenate([hb[:, 1:, :], zrow], axis=1).reshape(bt * L, Cp)

    out = jnp.dot(hm1, w2_ref[0], preferred_element_type=jnp.float32)
    out += jnp.dot(hb.reshape(bt * L, Cp), w2_ref[1], preferred_element_type=jnp.float32)
    out += jnp.dot(hp1, w2_ref[2], preferred_element_type=jnp.float32)

    # bias -> residual add (identity upcast to f32) -> ReLU
    out = out + b2_ref[...]
    out = jnp.maximum(out + x0.astype(jnp.float32), 0.0)
    o_ref[...] = out.reshape(bt, L, Cp).astype(o_ref.dtype)


def _channel_pad(c):
    """Lane-width padding: multiple of 128; multiple of 256 once C >= 256 (v6e/v7x full MXU)."""
    unit = 256 if c >= 256 else 128
    return ((c + unit - 1) // unit) * unit


def _fold_bn_into_conv(w_oik, gamma, beta, mean, var, eps, c_pad):
    """PyTorch conv1d weight (Cout, Cin, 3) + eval-mode BN -> (3, Cp, Cp) bf16 weight
    (BN scale folded in) and (1, Cp) f32 bias (BN shift)."""
    c_out, c_in, _ = w_oik.shape
    scale = gamma / jnp.sqrt(var + eps)                          # (Cout,)
    shift = beta - mean * scale                                  # (Cout,)
    w_kio = jnp.transpose(w_oik, (2, 1, 0)) * scale[None, None, :]    # (3, Cin, Cout)
    w_kio = jnp.pad(w_kio, ((0, 0), (0, c_pad - c_in), (0, c_pad - c_out)))
    w_packed = w_kio.astype(jnp.bfloat16)                        # (3, Cp, Cp)
    b = jnp.pad(shift, (0, c_pad - c_out)).reshape(1, c_pad).astype(jnp.float32)
    return w_packed, b


def _pick_bt(n, l, cp, out_itemsize, vmem_budget=24 << 20):
    """Largest batch-rows-per-step dividing N, keeping >=2 grid steps and within VMEM budget."""
    # rough live bytes per batch row: bf16 in block (x2 buf) + out block (x2 buf) + kernel temps
    per_row = l * cp * (2 * 2 + 2 * out_itemsize + 24)
    bt = max(1, min(n, vmem_budget // max(per_row, 1)))
    if n >= 2:
        bt = min(bt, max(1, n // 2))   # guarantee >= 2 grid steps (v7x megacore, pipelining)
    while n % bt:
        bt -= 1
    return bt


def basic_block_nlc(x_nlc, w1p, b1, w2p, b2, out_dtype=jnp.float32, batch_block=None):
    """Fused BasicBlock on padded-NLC activations.

    x_nlc: (N, L, Cp) bf16 with channels already zero-padded to Cp.  This is the layout to keep
    between consecutive BasicBlocks (do the NCL<->NLC conversion once per stage, not per block).
    Returns (N, L, Cp) in `out_dtype`.
    """
    N, L, Cp = x_nlc.shape
    out_itemsize = jnp.dtype(out_dtype).itemsize
    bt = batch_block if batch_block is not None else _pick_bt(N, L, Cp, out_itemsize)
    assert N % bt == 0, "batch_block must divide N"

    # Explicit VMEM limit sized from the block (review: don't rely on the default scoped limit).
    est_live = bt * L * Cp * (2 * 2 + 2 * out_itemsize + 24)
    vmem_limit = int(min(max(32 << 20, 2 * est_live), 64 << 20))

    flops = 2 * 2 * N * L * (3 * Cp) * Cp                         # 2 convs, 2 flops/MAC
    bytes_accessed = (N * L * Cp * 2                              # bf16 input
                      + N * L * Cp * out_itemsize                 # output
                      + 2 * 3 * Cp * Cp * 2 + 2 * Cp * 4)         # weights + biases

    return pl.pallas_call(
        basic_block_kernel,
        out_shape=jax.ShapeDtypeStruct((N, L, Cp), out_dtype),
        grid_spec=pltpu.PrefetchScalarGridSpec(
            num_scalar_prefetch=0,
            grid=(N // bt,),
            in_specs=[
                pl.BlockSpec((bt, L, Cp), lambda n: (n, 0, 0)),
                pl.BlockSpec((3, Cp, Cp), lambda n: (0, 0, 0)),
                pl.BlockSpec((1, Cp), lambda n: (0, 0)),
                pl.BlockSpec((3, Cp, Cp), lambda n: (0, 0, 0)),
                pl.BlockSpec((1, Cp), lambda n: (0, 0)),
            ],
            out_specs=pl.BlockSpec((bt, L, Cp), lambda n: (n, 0, 0)),
        ),
        compiler_params=pltpu.CompilerParams(
            dimension_semantics=("parallel",),
            vmem_limit_bytes=vmem_limit,
        ),
        cost_estimate=pl.CostEstimate(
            flops=flops, transcendentals=0, bytes_accessed=bytes_accessed),
    )(x_nlc, w1p, b1, w2p, b2)


def basic_block(x_ncl, w1_oik, g1, be1, m1, v1, w2_oik, g2, be2, m2, v2,
                eps=1e-5, batch_block=None):
    """Standalone BasicBlock forward with PyTorch NCL interface.
    x_ncl: (N, C, L) f32. Returns (N, C, L) f32.
    (When chaining blocks, convert to padded NLC bf16 once and call basic_block_nlc directly.)"""
    N, C, L = x_ncl.shape
    c_pad = _channel_pad(C)

    w1p, b1 = _fold_bn_into_conv(w1_oik, g1, be1, m1, v1, eps, c_pad)
    w2p, b2 = _fold_bn_into_conv(w2_oik, g2, be2, m2, v2, eps, c_pad)

    # NCL -> NLC (channels on lanes), zero-pad channels, bf16 activations (review: bf16 I/O).
    x_nlc = jnp.transpose(x_ncl, (0, 2, 1))
    x_nlc = jnp.pad(x_nlc, ((0, 0), (0, 0), (0, c_pad - C))).astype(jnp.bfloat16)

    out_nlc = basic_block_nlc(x_nlc, w1p, b1, w2p, b2,
                              out_dtype=jnp.float32, batch_block=batch_block)

    return jnp.transpose(out_nlc[:, :, :C], (0, 2, 1))           # drop channel padding, back to NCL


def reference_basic_block(x_ncl, w1_oik, g1, be1, m1, v1, w2_oik, g2, be2, m2, v2, eps=1e-5):
    """Plain-JAX reference with PyTorch NCL semantics (eval-mode BN)."""
    def conv(x, w):
        return lax.conv_general_dilated(
            x, w, window_strides=(1,), padding=((1, 1),),
            dimension_numbers=("NCH", "OIH", "NCH"))

    def bn(x, g, b, m, v):
        return (x - m[None, :, None]) * (g / jnp.sqrt(v + eps))[None, :, None] + b[None, :, None]

    out = jnp.maximum(bn(conv(x_ncl, w1_oik), g1, be1, m1, v1), 0.0)
    out = bn(conv(out, w2_oik), g2, be2, m2, v2)
    return jnp.maximum(out + x_ncl, 0.0)


if __name__ == "__main__":
    key = jax.random.PRNGKey(0)
    N, C, L = 2, 8, 16          # batch, channels (inplanes == planes), length
    eps = 1e-5

    keys = jax.random.split(key, 11)
    x_ncl = jax.random.normal(keys[0], (N, C, L), jnp.float32)

    # Conv1d weights, PyTorch layout (out_ch, in_ch, 3), no bias.
    w1_oik = jax.random.normal(keys[1], (C, C, 3), jnp.float32) * 0.1
    w2_oik = jax.random.normal(keys[2], (C, C, 3), jnp.float32) * 0.1

    # BatchNorm1d params + running stats (deterministic, non-trivial).
    g1 = jax.random.uniform(keys[3], (C,), jnp.float32, 0.5, 1.5)
    be1 = jax.random.normal(keys[4], (C,), jnp.float32) * 0.1
    m1 = jax.random.normal(keys[5], (C,), jnp.float32) * 0.1
    v1 = jax.random.uniform(keys[6], (C,), jnp.float32, 0.5, 1.5)
    g2 = jax.random.uniform(keys[7], (C,), jnp.float32, 0.5, 1.5)
    be2 = jax.random.normal(keys[8], (C,), jnp.float32) * 0.1
    m2 = jax.random.normal(keys[9], (C,), jnp.float32) * 0.1
    v2 = jax.random.uniform(keys[10], (C,), jnp.float32, 0.5, 1.5)

    out_ncl = basic_block(x_ncl, w1_oik, g1, be1, m1, v1, w2_oik, g2, be2, m2, v2, eps)
    out_ncl = jax.block_until_ready(out_ncl)

    ref = reference_basic_block(x_ncl, w1_oik, g1, be1, m1, v1, w2_oik, g2, be2, m2, v2, eps)
    # bf16 activations + bf16 MXU inputs with f32 accumulation -> loosened tolerance vs f32 reference.
    np.testing.assert_allclose(np.asarray(out_ncl), np.asarray(ref), rtol=2e-2, atol=2e-2)

    print("KERNEL_OK")
</pallas_src>

<mosaic_0001>
module attributes {stable_mosaic.version = 11 : i64} {
  func.func @basic_block_kernel(%arg0: i32, %arg1: memref<1x16x128xbf16, #tpu.memory_space<vmem>>, %arg2: memref<3x128x128xbf16, #tpu.memory_space<vmem>>, %arg3: memref<1x128xf32, #tpu.memory_space<vmem>>, %arg4: memref<3x128x128xbf16, #tpu.memory_space<vmem>>, %arg5: memref<1x128xf32, #tpu.memory_space<vmem>>, %arg6: memref<1x16x128xf32, #tpu.memory_space<vmem>>) attributes {dimension_semantics = [#tpu.dimension_semantics<parallel>], iteration_bounds = array<i64: 2>, scalar_prefetch = 0 : i64, scratch_operands = 0 : i64, tpu.core_type = #tpu.core_type<tc>, window_params = [{transform_indices = @transform_0, window_bounds = array<i64: 1, 16, 128>}, {pipeline_mode = #tpu.pipeline_mode<synchronous>, transform_indices = @transform_1, window_bounds = array<i64: 3, 128, 128>}, {pipeline_mode = #tpu.pipeline_mode<synchronous>, transform_indices = @transform_2, window_bounds = array<i64: 1, 128>}, {pipeline_mode = #tpu.pipeline_mode<synchronous>, transform_indices = @transform_3, window_bounds = array<i64: 3, 128, 128>}, {pipeline_mode = #tpu.pipeline_mode<synchronous>, transform_indices = @transform_4, window_bounds = array<i64: 1, 128>}, {transform_indices = @transform_5, window_bounds = array<i64: 1, 16, 128>}]} {
    %c0 = arith.constant 0 : index
    %c0_0 = arith.constant 0 : index
    %c0_1 = arith.constant 0 : index
    %0 = vector.load %arg1[%c0, %c0_0, %c0_1] : memref<1x16x128xbf16, #tpu.memory_space<vmem>>, vector<1x16x128xbf16>
    %cst = arith.constant 0.000000e+00 : bf16
    %1 = vector.broadcast %cst : bf16 to vector<1x1x128xbf16>
    %2 = vector.extract_strided_slice %0 {offsets = [0, 0, 0], sizes = [1, 15, 128], strides = [1, 1, 1]} : vector<1x16x128xbf16> to vector<1x15x128xbf16>
    %3 = tpu.concatenate %1, %2 in 1 : vector<1x1x128xbf16>, vector<1x15x128xbf16> -> vector<1x16x128xbf16>
    %4 = vector.shape_cast %3 : vector<1x16x128xbf16> to vector<16x128xbf16>
    %5 = vector.shape_cast %0 : vector<1x16x128xbf16> to vector<16x128xbf16>
    %6 = vector.extract_strided_slice %0 {offsets = [0, 1, 0], sizes = [1, 15, 128], strides = [1, 1, 1]} : vector<1x16x128xbf16> to vector<1x15x128xbf16>
    %7 = tpu.concatenate %6, %1 in 1 : vector<1x15x128xbf16>, vector<1x1x128xbf16> -> vector<1x16x128xbf16>
    %8 = vector.shape_cast %7 : vector<1x16x128xbf16> to vector<16x128xbf16>
    %c0_2 = arith.constant 0 : index
    %c0_3 = arith.constant 0 : index
    %c0_4 = arith.constant 0 : index
    %9 = vector.load %arg2[%c0_2, %c0_3, %c0_4] : memref<3x128x128xbf16, #tpu.memory_space<vmem>>, vector<1x128x128xbf16>
    %10 = vector.shape_cast %9 : vector<1x128x128xbf16> to vector<128x128xbf16>
    %cst_5 = arith.constant dense<0.000000e+00> : vector<16x128xf32>
    %11 = tpu.matmul %4, %10, %cst_5 {dimension_numbers = #tpu.dot_dimension_numbers<[1], [0], [0], [1], [0, 0, 1, 1], [], []>} : vector<16x128xbf16>, vector<128x128xbf16>, vector<16x128xf32> -> vector<16x128xf32>
    %c1 = arith.constant 1 : index
    %c0_6 = arith.constant 0 : index
    %c0_7 = arith.constant 0 : index
    %12 = vector.load %arg2[%c1, %c0_6, %c0_7] : memref<3x128x128xbf16, #tpu.memory_space<vmem>>, vector<1x128x128xbf16>
    %13 = vector.shape_cast %12 : vector<1x128x128xbf16> to vector<128x128xbf16>
    %cst_8 = arith.constant dense<0.000000e+00> : vector<16x128xf32>
    %14 = tpu.matmul %5, %13, %cst_8 {dimension_numbers = #tpu.dot_dimension_numbers<[1], [0], [0], [1], [0, 0, 1, 1], [], []>} : vector<16x128xbf16>, vector<128x128xbf16>, vector<16x128xf32> -> vector<16x128xf32>
    %15 = arith.addf %11, %14 : vector<16x128xf32>
    %c2 = arith.constant 2 : index
    %c0_9 = arith.constant 0 : index
    %c0_10 = arith.constant 0 : index
    %16 = vector.load %arg2[%c2, %c0_9, %c0_10] : memref<3x128x128xbf16, #tpu.memory_space<vmem>>, vector<1x128x128xbf16>
    %17 = vector.shape_cast %16 : vector<1x128x128xbf16> to vector<128x128xbf16>
    %cst_11 = arith.constant dense<0.000000e+00> : vector<16x128xf32>
    %18 = tpu.matmul %8, %17, %cst_11 {dimension_numbers = #tpu.dot_dimension_numbers<[1], [0], [0], [1], [0, 0, 1, 1], [], []>} : vector<16x128xbf16>, vector<128x128xbf16>, vector<16x128xf32> -> vector<16x128xf32>
    %19 = arith.addf %15, %18 : vector<16x128xf32>
    %c0_12 = arith.constant 0 : index
    %c0_13 = arith.constant 0 : index
    %20 = vector.load %arg3[%c0_12, %c0_13] : memref<1x128xf32, #tpu.memory_space<vmem>>, vector<1x128xf32>
    %21 = vector.broadcast %20 : vector<1x128xf32> to vector<16x128xf32>
    %22 = arith.addf %19, %21 : vector<16x128xf32>
    %cst_14 = arith.constant 0.000000e+00 : f32
    %23 = vector.broadcast %cst_14 : f32 to vector<16x128xf32>
    %24 = arith.maximumf %22, %23 : vector<16x128xf32>
    %25 = arith.truncf %24 : vector<16x128xf32> to vector<16x128xbf16>
    %26 = vector.shape_cast %25 : vector<16x128xbf16> to vector<1x16x128xbf16>
    %27 = vector.extract_strided_slice %26 {offsets = [0, 0, 0], sizes = [1, 15, 128], strides = [1, 1, 1]} : vector<1x16x128xbf16> to vector<1x15x128xbf16>
    %28 = tpu.concatenate %1, %27 in 1 : vector<1x1x128xbf16>, vector<1x15x128xbf16> -> vector<1x16x128xbf16>
    %29 = vector.shape_cast %28 : vector<1x16x128xbf16> to vector<16x128xbf16>
    %30 = vector.extract_strided_slice %26 {offsets = [0, 1, 0], sizes = [1, 15, 128], strides = [1, 1, 1]} : vector<1x16x128xbf16> to vector<1x15x128xbf16>
    %31 = tpu.concatenate %30, %1 in 1 : vector<1x15x128xbf16>, vector<1x1x128xbf16> -> vector<1x16x128xbf16>
    %32 = vector.shape_cast %31 : vector<1x16x128xbf16> to vector<16x128xbf16>
    %c0_15 = arith.constant 0 : index
    %c0_16 = arith.constant 0 : index
    %c0_17 = arith.constant 0 : index
    %33 = vector.load %arg4[%c0_15, %c0_16, %c0_17] : memref<3x128x128xbf16, #tpu.memory_space<vmem>>, vector<1x128x128xbf16>
    %34 = vector.shape_cast %33 : vector<1x128x128xbf16> to vector<128x128xbf16>
    %cst_18 = arith.constant dense<0.000000e+00> : vector<16x128xf32>
    %35 = tpu.matmul %29, %34, %cst_18 {dimension_numbers = #tpu.dot_dimension_numbers<[1], [0], [0], [1], [0, 0, 1, 1], [], []>} : vector<16x128xbf16>, vector<128x128xbf16>, vector<16x128xf32> -> vector<16x128xf32>
    %36 = vector.shape_cast %26 : vector<1x16x128xbf16> to vector<16x128xbf16>
    %c1_19 = arith.constant 1 : index
    %c0_20 = arith.constant 0 : index
    %c0_21 = arith.constant 0 : index
    %37 = vector.load %arg4[%c1_19, %c0_20, %c0_21] : memref<3x128x128xbf16, #tpu.memory_space<vmem>>, vector<1x128x128xbf16>
    %38 = vector.shape_cast %37 : vector<1x128x128xbf16> to vector<128x128xbf16>
    %cst_22 = arith.constant dense<0.000000e+00> : vector<16x128xf32>
    %39 = tpu.matmul %36, %38, %cst_22 {dimension_numbers = #tpu.dot_dimension_numbers<[1], [0], [0], [1], [0, 0, 1, 1], [], []>} : vector<16x128xbf16>, vector<128x128xbf16>, vector<16x128xf32> -> vector<16x128xf32>
    %40 = arith.addf %35, %39 : vector<16x128xf32>
    %c2_23 = arith.constant 2 : index
    %c0_24 = arith.constant 0 : index
    %c0_25 = arith.constant 0 : index
    %41 = vector.load %arg4[%c2_23, %c0_24, %c0_25] : memref<3x128x128xbf16, #tpu.memory_space<vmem>>, vector<1x128x128xbf16>
    %42 = vector.shape_cast %41 : vector<1x128x128xbf16> to vector<128x128xbf16>
    %cst_26 = arith.constant dense<0.000000e+00> : vector<16x128xf32>
    %43 = tpu.matmul %32, %42, %cst_26 {dimension_numbers = #tpu.dot_dimension_numbers<[1], [0], [0], [1], [0, 0, 1, 1], [], []>} : vector<16x128xbf16>, vector<128x128xbf16>, vector<16x128xf32> -> vector<16x128xf32>
    %44 = arith.addf %40, %43 : vector<16x128xf32>
    %c0_27 = arith.constant 0 : index
    %c0_28 = arith.constant 0 : index
    %45 = vector.load %arg5[%c0_27, %c0_28] : memref<1x128xf32, #tpu.memory_space<vmem>>, vector<1x128xf32>
    %46 = vector.broadcast %45 : vector<1x128xf32> to vector<16x128xf32>
    %47 = arith.addf %44, %46 : vector<16x128xf32>
    %48 = arith.extf %5 : vector<16x128xbf16> to vector<16x128xf32>
    %49 = arith.addf %47, %48 : vector<16x128xf32>
    %cst_29 = arith.constant 0.000000e+00 : f32
    %50 = vector.broadcast %cst_29 : f32 to vector<16x128xf32>
    %51 = arith.maximumf %49, %50 : vector<16x128xf32>
    %52 = vector.shape_cast %51 : vector<16x128xf32> to vector<1x16x128xf32>
    %c0_30 = arith.constant 0 : index
    %c0_31 = arith.constant 0 : index
    %c0_32 = arith.constant 0 : index
    %53 = vector.load %arg6[%c0_30, %c0_31, %c0_32] : memref<1x16x128xf32, #tpu.memory_space<vmem>>, vector<1x16x128xf32>
    tpu.vector_store %arg6[%c0_30, %c0_31, %c0_32], %52 {strides = array<i32>} : memref<1x16x128xf32, #tpu.memory_space<vmem>>, vector<1x16x128xf32>,
    return
  }
  func.func @transform_0(%arg0: i32) -> (i32, i32, i32) {
    %c0_i32 = arith.constant 0 : i32
    %c0_i32_0 = arith.constant 0 : i32
    %c0_i32_1 = arith.constant 0 : i32
    return %arg0, %c0_i32, %c0_i32_0 : i32, i32, i32
  }
  func.func @transform_1(%arg0: i32) -> (i32, i32, i32) {
    %c0_i32 = arith.constant 0 : i32
    %c0_i32_0 = arith.constant 0 : i32
    %c0_i32_1 = arith.constant 0 : i32
    %c0_i32_2 = arith.constant 0 : i32
    return %c0_i32, %c0_i32_0, %c0_i32_1 : i32, i32, i32
  }
  func.func @transform_2(%arg0: i32) -> (i32, i32) {
    %c0_i32 = arith.constant 0 : i32
    %c0_i32_0 = arith.constant 0 : i32
    %c0_i32_1 = arith.constant 0 : i32
    return %c0_i32, %c0_i32_0 : i32, i32
  }
  func.func @transform_3(%arg0: i32) -> (i32, i32, i32) {
    %c0_i32 = arith.constant 0 : i32
    %c0_i32_0 = arith.constant 0 : i32
    %c0_i32_1 = arith.constant 0 : i32
    %c0_i32_2 = arith.constant 0 : i32
    return %c0_i32, %c0_i32_0, %c0_i32_1 : i32, i32, i32
  }
  func.func @transform_4(%arg0: i32) -> (i32, i32) {
    %c0_i32 = arith.constant 0 : i32
    %c0_i32_0 = arith.constant 0 : i32
    %c0_i32_1 = arith.constant 0 : i32
    return %c0_i32, %c0_i32_0 : i32, i32
  }
  func.func @transform_5(%arg0: i32) -> (i32, i32, i32) {
    %c0_i32 = arith.constant 0 : i32
    %c0_i32_0 = arith.constant 0 : i32
    %c0_i32_1 = arith.constant 0 : i32
    return %arg0, %c0_i32, %c0_i32_0 : i32, i32, i32
  }
}

</mosaic_0001>

<llo_original>
// kernel: tpu_custom_call.1
$region0: #{tpu_custom_call.1}
  #allocation0 [shape = 'u32[]', space=smem, size = 0x4, offset = 0x4, fixed_abs, tag = 'smem constant byte address 0x4 - core index']
  #allocation1 [shape = 'u32[144,128]{1,0:T(1,128)}', space=vmem, size = 0x12000, scoped, tag = 'internal scratch']
  %s0 = inlined_call_operand.hbm [shape: bf16[2,16,128], index: 0, kind: input, shape index: {}]
  %s1 = inlined_call_operand.hbm [shape: bf16[3,128,128], index: 1, kind: input, shape index: {}]
  %s2 = inlined_call_operand.vmem [shape: f32[1,128], index: 2, kind: input, shape index: {}]
  %s3 = inlined_call_operand.hbm [shape: bf16[3,128,128], index: 3, kind: input, shape index: {}]
  %s4 = inlined_call_operand.vmem [shape: f32[1,128], index: 4, kind: input, shape index: {}]
  %s5 = inlined_call_operand.hbm [shape: f32[2,16,128], index: 5, kind: output, shape index: {}]
  %s6 = sld [smem:[#allocation0]]
  $region65: #{tpu_custom_call.1} parent=0
    _
  %s8 = ssub.s32 1, %s6
  %s9 = scalar_select 0, %s8, %s6
  $region1: #{tpu_custom_call.1} parent=0
    #allocation2 [shape = 'u8[8192]{0}', space=vmem, size = 0x2000, scoped, tag = 'input window, operand 0']
    #allocation3 [shape = 's32[2]{0}', space=sflag, size = 0x8, scoped, tag = 'scoped memory for tpu_custom_call.1']
    #allocation4 [shape = 's32[2]{0}', space=sflag, size = 0x8, scoped, tag = 'scoped memory for tpu_custom_call.1']
    #allocation5 [shape = 'u8[98304]{0}', space=vmem, size = 0x18000, scoped, tag = 'input window, operand 1, single buffered']
    #allocation6 [shape = 's32[1]{0}', space=sflag, size = 0x4, scoped, tag = 'scoped memory for tpu_custom_call.1']
    #allocation7 [shape = 'u8[98304]{0}', space=vmem, size = 0x18000, scoped, tag = 'input window, operand 3, single buffered']
    #allocation8 [shape = 'u8[16384]{0}', space=vmem, size = 0x4000, scoped, tag = 'output window, operand 0']
    %10 = vsyncpa [#allocation3], 0
    %s11 = scalar_lea.sflag [#allocation3], 1
    %12 = vsyncpa %s11, 0
    %13 = vsyncpa [#allocation6], 0
    %14 = vsyncpa [#allocation4], 0
    %s15 = scalar_lea.sflag [#allocation4], 1
    %16 = vsyncpa %s15, 0
    loop: start=0, step=1, limit=4
    $region2: #{tpu_custom_call.1} parent=1 // loop_pre_header
      _
    $region3: #{tpu_custom_call.1} parent=1 // loop_header
      %s18 = sphi 0, %s22
      %p19 = scmp.ge.s32.totalorder %s18, 4
      %s28 = sphi 0, %s30
      %s31 = sphi 0, %s28
      %s32 = sphi 0, %s31
      %s48 = sphi 0, %s32
      %s52 = sphi 0, %s52
      %s54 = sphi 0, %s52
      %s55 = sphi 0, %s54
      %s69 = sphi 0, %s55
      %s73 = sphi 0, %s73
      %s75 = sphi 0, %s73
      %s76 = sphi 0, %s75
      %s90 = sphi 0, %s76
      %s94 = sphi 0, %s94
      %s96 = sphi 0, %s94
      %s97 = sphi 0, %s96
      %s111 = sphi 0, %s97
      %s115 = sphi 0, %s115
      %s117 = sphi 0, %s115
      %s118 = sphi 0, %s117
      %s132 = sphi 0, %s118
      %s138 = sphi 0, %s140
      %s141 = sphi 0, %s138
      %s142 = sphi 0, %s141
      %s158 = sphi 0, %s142
    $region4: #{tpu_custom_call.1} parent=1 // loop_header_branch
      %21 = sbr.rel (%p19) target = $region8
    $region5: #{tpu_custom_call.1} parent=1 // loop_body
      %s23 = ssub.s32 %s18, 1
      %s24 = ssub.s32 %s18, 2
      %s25 = sadd.s32 %s18, 1
      %s26 = ssub.s32 %s18, %s25
      %p27 = scmp.eq.s32.totalorder %s26, 0
      %s29 = sadd.s32 %s28, 1
      %s30 = scalar_select %p27, %s28, %s29
      %p33 = pneg %p27
      %p34 = scmp.eq.s32.totalorder %s18, 1
      %p35 = por %p33, %p34
      %p36 = scmp.ne.s32.totalorder %s28, %s31
      %p37 = scmp.eq.s32.totalorder %s18, 0
      %p38 = por %p36, %p37
      %p39 = scmp.ne.s32.totalorder %s28, %s31
      %p40 = scmp.eq.s32.totalorder %s23, 1
      %p41 = por %p39, %p40
      %p42 = scmp.ne.s32.totalorder %s31, %s32
      %p43 = scmp.eq.s32.totalorder %s23, 0
      %p44 = por %p42, %p43
      %p45 = scmp.ne.s32.totalorder %s31, %s32
      %p46 = scmp.eq.s32.totalorder %s24, 1
      %p47 = por %p45, %p46
      %p49 = scmp.ne.s32.totalorder %s32, %s48
      %p50 = scmp.eq.s32.totalorder %s24, 0
      %p51 = por %p49, %p50
      %s53 = sadd.s32 %s52, 1
      %p56 = scmp.eq.s32.totalorder %s18, 1
      %p57 = scmp.ne.s32.totalorder %s52, %s54
      %p58 = scmp.eq.s32.totalorder %s18, 0
      %p59 = por %p57, %p58
      %p60 = scmp.ne.s32.totalorder %s52, %s54
      %p61 = scmp.eq.s32.totalorder %s23, 1
      %p62 = por %p60, %p61
      %p63 = scmp.ne.s32.totalorder %s54, %s55
      %p64 = scmp.eq.s32.totalorder %s23, 0
      %p65 = por %p63, %p64
      %p66 = scmp.ne.s32.totalorder %s54, %s55
      %p67 = scmp.eq.s32.totalorder %s24, 1
      %p68 = por %p66, %p67
      %p70 = scmp.ne.s32.totalorder %s55, %s69
      %p71 = scmp.eq.s32.totalorder %s24, 0
      %p72 = por %p70, %p71
      %s74 = sadd.s32 %s73, 1
      %p77 = scmp.eq.s32.totalorder %s18, 1
      %p78 = scmp.ne.s32.totalorder %s73, %s75
      %p79 = scmp.eq.s32.totalorder %s18, 0
      %p80 = por %p78, %p79
      %p81 = scmp.ne.s32.totalorder %s73, %s75
      %p82 = scmp.eq.s32.totalorder %s23, 1
      %p83 = por %p81, %p82
      %p84 = scmp.ne.s32.totalorder %s75, %s76
      %p85 = scmp.eq.s32.totalorder %s23, 0
      %p86 = por %p84, %p85
      %p87 = scmp.ne.s32.totalorder %s75, %s76
      %p88 = scmp.eq.s32.totalorder %s24, 1
      %p89 = por %p87, %p88
      %p91 = scmp.ne.s32.totalorder %s76, %s90
      %p92 = scmp.eq.s32.totalorder %s24, 0
      %p93 = por %p91, %p92
      %s95 = sadd.s32 %s94, 1
      %p98 = scmp.eq.s32.totalorder %s18, 1
      %p99 = scmp.ne.s32.totalorder %s94, %s96
      %p100 = scmp.eq.s32.totalorder %s18, 0
      %p101 = por %p99, %p100
      %p102 = scmp.ne.s32.totalorder %s94, %s96
      %p103 = scmp.eq.s32.totalorder %s23, 1
      %p104 = por %p102, %p103
      %p105 = scmp.ne.s32.totalorder %s96, %s97
      %p106 = scmp.eq.s32.totalorder %s23, 0
      %p107 = por %p105, %p106
      %p108 = scmp.ne.s32.totalorder %s96, %s97
      %p109 = scmp.eq.s32.totalorder %s24, 1
      %p110 = por %p108, %p109
      %p112 = scmp.ne.s32.totalorder %s97, %s111
      %p113 = scmp.eq.s32.totalorder %s24, 0
      %p114 = por %p112, %p113
      %s116 = sadd.s32 %s115, 1
      %p119 = scmp.eq.s32.totalorder %s18, 1
      %p120 = scmp.ne.s32.totalorder %s115, %s117
      %p121 = scmp.eq.s32.totalorder %s18, 0
      %p122 = por %p120, %p121
      %p123 = scmp.ne.s32.totalorder %s115, %s117
      %p124 = scmp.eq.s32.totalorder %s23, 1
      %p125 = por %p123, %p124
      %p126 = scmp.ne.s32.totalorder %s117, %s118
      %p127 = scmp.eq.s32.totalorder %s23, 0
      %p128 = por %p126, %p127
      %p129 = scmp.ne.s32.totalorder %s117, %s118
      %p130 = scmp.eq.s32.totalorder %s24, 1
      %p131 = por %p129, %p130
      %p133 = scmp.ne.s32.totalorder %s118, %s132
      %p134 = scmp.eq.s32.totalorder %s24, 0
      %p135 = por %p133, %p134
      %s136 = ssub.s32 %s18, %s25
      %p137 = scmp.eq.s32.totalorder %s136, 0
      %s139 = sadd.s32 %s138, 1
      %s140 = scalar_select %p137, %s138, %s139
      %p143 = pneg %p137
      %p144 = scmp.eq.s32.totalorder %s18, 1
      %p145 = por %p143, %p144
      %p146 = scmp.ne.s32.totalorder %s138, %s141
      %p147 = scmp.eq.s32.totalorder %s18, 0
      %p148 = por %p146, %p147
      %p149 = scmp.ne.s32.totalorder %s138, %s141
      %p150 = scmp.eq.s32.totalorder %s23, 1
      %p151 = por %p149, %p150
      %p152 = scmp.ne.s32.totalorder %s141, %s142
      %p153 = scmp.eq.s32.totalorder %s23, 0
      %p154 = por %p152, %p153
      %p155 = scmp.ne.s32.totalorder %s141, %s142
      %p156 = scmp.eq.s32.totalorder %s24, 1
      %p157 = por %p155, %p156
      %p159 = scmp.ne.s32.totalorder %s142, %s158
      %p160 = scmp.eq.s32.totalorder %s24, 0
      %p161 = por %p159, %p160
      %p162 = scmp.le.s32.totalorder 1, %s18
      %p163 = scmp.lt.s32.totalorder %s18, 3
      %p164 = pnand %p162, %p163
      %p165 = pneg %p164
      // Predicated region
      $region9: #{tpu_custom_call.1} parent=5 // pred_check
        _
      $region10: #{tpu_custom_call.1} parent=5 // pred_check_branch
        %167 = sbr.rel (%p164) target = $region12
      $region11: #{tpu_custom_call.1} parent=5 // pred_region
        %s168 = ssub.s32 %s18, 1
        // Predicated region
        $region13: #{tpu_custom_call.1} parent=11 // pred_check
          %p169 = pneg %p65
        $region14: #{tpu_custom_call.1} parent=11 // pred_check_branch
          %171 = sbr.rel (%p169) target = $region16
        $region15: #{tpu_custom_call.1} parent=11 // pred_region
          %s173 = ssub.s32 3072, 3072
          %174 = vsyncadd [#allocation6], %s173
          %s175 = sshll.u32 [#allocation5], 4
          %s176 = int_to_ptr.vmem [resolvable:$true] %s175
          %181 = dma.hbm_to_vmem [thread:$0]  %s1, 3072, %s176, [#allocation6], 64, 64, 4
        $region16: #{tpu_custom_call.1} parent=11 // pred_fallthru
          _
        // Predicated region
        $region17: #{tpu_custom_call.1} parent=11 // pred_check
          %p182 = pneg %p86
        $region18: #{tpu_custom_call.1} parent=11 // pred_check_branch
          %184 = sbr.rel (%p182) target = $region20
        $region19: #{tpu_custom_call.1} parent=11 // pred_region
          _
        $region20: #{tpu_custom_call.1} parent=11 // pred_fallthru
          _
        // Predicated region
        $region21: #{tpu_custom_call.1} parent=11 // pred_check
          %p185 = pneg %p107
        $region22: #{tpu_custom_call.1} parent=11 // pred_check_branch
          %187 = sbr.rel (%p185) target = $region24
        $region23: #{tpu_custom_call.1} parent=11 // pred_region
          %s189 = ssub.s32 3072, 3072
          %190 = vsyncadd [#allocation6], %s189
          %s191 = sshll.u32 [#allocation7], 4
          %s192 = int_to_ptr.vmem [resolvable:$true] %s191
          %197 = dma.hbm_to_vmem [thread:$0]  %s3, 3072, %s192, [#allocation6], 64, 64, 4
        $region24: #{tpu_custom_call.1} parent=11 // pred_fallthru
          _
        // Predicated region
        $region25: #{tpu_custom_call.1} parent=11 // pred_check
          %p198 = pneg %p128
        $region26: #{tpu_custom_call.1} parent=11 // pred_check_branch
          %200 = sbr.rel (%p198) target = $region28
        $region27: #{tpu_custom_call.1} parent=11 // pred_region
          _
        $region28: #{tpu_custom_call.1} parent=11 // pred_fallthru
          _
      $region12: #{tpu_custom_call.1} parent=5 // pred_fallthru
        _
      %p201 = scmp.lt.s32.totalorder %s18, 2
      // Predicated region
      $region29: #{tpu_custom_call.1} parent=5 // pred_check
        %p202 = pneg %p201
      $region30: #{tpu_custom_call.1} parent=5 // pred_check_branch
        %204 = sbr.rel (%p202) target = $region32
      $region31: #{tpu_custom_call.1} parent=5 // pred_region
        // Predicated region
        $region33: #{tpu_custom_call.1} parent=31 // pred_check
          %p205 = pneg %p38
        $region34: #{tpu_custom_call.1} parent=31 // pred_check_branch
          %207 = sbr.rel (%p205) target = $region36
        $region35: #{tpu_custom_call.1} parent=31 // pred_region
          %s208 = sand.u32 %s28, 1
          %s209 = scalar_lea.sflag [#allocation3], %s208
          %s210 = sand.u32 %s28, 1
          %s211 = smul.addr %s210, 8
          %s212 = scalar_lea.vmem [#allocation2], %s211
          %s214 = ssub.s32 128, 128
          %215 = vsyncadd %s209, %s214
          %s216 = smul.addr %s18, 2
          %s217 = smul.addr %s216, 64
          %s218 = scalar_lea.hbm %s0, %s217
          %s219 = sshll.u32 %s212, 4
          %s220 = int_to_ptr.vmem [resolvable:$true] %s219
          %225 = dma.hbm_to_vmem [thread:$0]  %s218, 128, %s220, %s209, 64, 64, 4
        $region36: #{tpu_custom_call.1} parent=31 // pred_fallthru
          _
      $region32: #{tpu_custom_call.1} parent=5 // pred_fallthru
        _
      %p226 = scmp.le.s32.totalorder 1, %s18
      %p227 = scmp.lt.s32.totalorder %s18, 3
      %p228 = pnand %p226, %p227
      %p229 = pneg %p228
      // Predicated region
      $region37: #{tpu_custom_call.1} parent=5 // pred_check
        _
      $region38: #{tpu_custom_call.1} parent=5 // pred_check_branch
        %231 = sbr.rel (%p228) target = $region40
      $region39: #{tpu_custom_call.1} parent=5 // pred_region
        %s232 = ssub.s32 %s18, 1
        %s233 = sand.u32 %s31, 1
        %s234 = scalar_lea.sflag [#allocation3], %s233
        %s235 = sand.u32 %s31, 1
        %s236 = smul.addr %s235, 8
        %s237 = scalar_lea.vmem [#allocation2], %s236
        // Predicated region
        $region41: #{tpu_custom_call.1} parent=39 // pred_check
          %p238 = pneg %p44
        $region42: #{tpu_custom_call.1} parent=39 // pred_check_branch
          %240 = sbr.rel (%p238) target = $region44
        $region43: #{tpu_custom_call.1} parent=39 // pred_region
          %241 = dma.done %s234, 128
        $region44: #{tpu_custom_call.1} parent=39 // pred_fallthru
          _
        // Predicated region
        $region45: #{tpu_custom_call.1} parent=39 // pred_check
          %p242 = pneg %p65
        $region46: #{tpu_custom_call.1} parent=39 // pred_check_branch
          %244 = sbr.rel (%p242) target = $region48
        $region47: #{tpu_custom_call.1} parent=39 // pred_region
          %245 = dma.done [#allocation6], 3072
        $region48: #{tpu_custom_call.1} parent=39 // pred_fallthru
          _
        // Predicated region
        $region49: #{tpu_custom_call.1} parent=39 // pred_check
          %p246 = pneg %p107
        $region50: #{tpu_custom_call.1} parent=39 // pred_check_branch
          %248 = sbr.rel (%p246) target = $region52
        $region51: #{tpu_custom_call.1} parent=39 // pred_region
          %249 = dma.done [#allocation6], 3072
        $region52: #{tpu_custom_call.1} parent=39 // pred_fallthru
          _
        %s250 = sand.u32 %s31, 1
        %s251 = scalar_lea.sflag [#allocation3], %s250
        %s252 = sand.u32 %s31, 1
        %s253 = smul.addr %s252, 8
        %s254 = scalar_lea.vmem [#allocation2], %s253
        %p255 = pneg %p44
        %p256 = pneg %p41
        %p257 = pneg %p65
        %p258 = pneg %p62
        %p259 = pneg %p86
        %p260 = pneg %p83
        %p261 = pneg %p107
        %p262 = pneg %p104
        %p263 = pneg %p128
        %p264 = pneg %p125
        %p265 = pneg %p154
        %p266 = pneg %p151
        %s267 = sand.u32 %s141, 1
        %s268 = scalar_lea.sflag [#allocation4], %s267
        %s269 = sand.u32 %s141, 1
        %s270 = smul.addr %s269, 16
        %s271 = scalar_lea.vmem [#allocation8], %s270
        %v273 = vld [vmem:[%s237] sm:$0xf]
        %v274 = vld [vmem:[%s237 + $0x4] sm:$0xf]
        %v277 = vunpack.c.l.b16 %v273
        %v278 = vunpack.c.l.b16 %v274
        %v279 = vpack.c.b16 %v278, %v277
        %v281 = vshrl.u32 %v279, 16
        %v283 = vrot.slane %v281, 7
        %v284 = vshll.u32 %v279, 16
        %v286 = vor.u32 %v283, %v284
        %vm288 = vcmask 1040384
        %vm289 = vsmask.f32 256
        %vm290 = vmand %vm288, %vm289
        %v291 = vsel %vm290, 0, %v286
        %v292 = vrot.slane %v284, 1
        %v293 = vor.u32 %v281, %v292
        %vm295 = vcmask 1047552
        %vm296 = vsmask.f32 7424
        %vm297 = vmand %vm295, %vm296
        %v298 = vsel %vm297, %v293, 0
        %v299 = vld [vmem:[#allocation5] sm:$0xf]
        %v300 = vld [vmem:[#allocation5 + $0x4] sm:$0xf]
        %v301 = vld [vmem:[#allocation5 + $0x8] sm:$0xf]
        %v302 = vld [vmem:[#allocation5 + $0xc] sm:$0xf]
        %v303 = vld [vmem:[#allocation5 + $0x10] sm:$0xf]
        %v304 = vld [vmem:[#allocation5 + $0x14] sm:$0xf]
        %v305 = vld [vmem:[#allocation5 + $0x18] sm:$0xf]
        %v306 = vld [vmem:[#allocation5 + $0x1c] sm:$0xf]
        %v307 = vld [vmem:[#allocation5 + $0x20] sm:$0xf]
        %v308 = vld [vmem:[#allocation5 + $0x24] sm:$0xf]
        %v309 = vld [vmem:[#allocation5 + $0x28] sm:$0xf]
        %v310 = vld [vmem:[#allocation5 + $0x2c] sm:$0xf]
        %v311 = vld [vmem:[#allocation5 + $0x30] sm:$0xf]
        %v312 = vld [vmem:[#allocation5 + $0x34] sm:$0xf]
        %v313 = vld [vmem:[#allocation5 + $0x38] sm:$0xf]
        %v314 = vld [vmem:[#allocation5 + $0x3c] sm:$0xf]
        %s315 = scalar_lea.vmem [#allocation5], 64
        %v316 = vld [vmem:[%s315] sm:$0xf]
        %v317 = vld [vmem:[%s315 + $0x4] sm:$0xf]
        %v318 = vld [vmem:[%s315 + $0x8] sm:$0xf]
        %v319 = vld [vmem:[%s315 + $0xc] sm:$0xf]
        %v320 = vld [vmem:[%s315 + $0x10] sm:$0xf]
        %v321 = vld [vmem:[%s315 + $0x14] sm:$0xf]
        %v322 = vld [vmem:[%s315 + $0x18] sm:$0xf]
        %v323 = vld [vmem:[%s315 + $0x1c] sm:$0xf]
        %v324 = vld [vmem:[%s315 + $0x20] sm:$0xf]
        %v325 = vld [vmem:[%s315 + $0x24] sm:$0xf]
        %v326 = vld [vmem:[%s315 + $0x28] sm:$0xf]
        %v327 = vld [vmem:[%s315 + $0x2c] sm:$0xf]
        %v328 = vld [vmem:[%s315 + $0x30] sm:$0xf]
        %v329 = vld [vmem:[%s315 + $0x34] sm:$0xf]
        %v330 = vld [vmem:[%s315 + $0x38] sm:$0xf]
        %v331 = vld [vmem:[%s315 + $0x3c] sm:$0xf]
        %v349 = vunpack.c.l.b16 %v316
        %v350 = vunpack.c.l.b16 %v317
        %v351 = vunpack.c.l.b16 %v318
        %v352 = vunpack.c.l.b16 %v319
        %v353 = vunpack.c.l.b16 %v320
        %v354 = vunpack.c.l.b16 %v321
        %v355 = vunpack.c.l.b16 %v322
        %v356 = vunpack.c.l.b16 %v323
        %v357 = vunpack.c.l.b16 %v324
        %v358 = vunpack.c.l.b16 %v325
        %v359 = vunpack.c.l.b16 %v326
        %v360 = vunpack.c.l.b16 %v327
        %v361 = vunpack.c.l.b16 %v328
        %v362 = vunpack.c.l.b16 %v329
        %v363 = vunpack.c.l.b16 %v330
        %v364 = vunpack.c.l.b16 %v331
        %v365 = vpack.c.b16 %v350, %v349
        %v366 = vpack.c.b16 %v352, %v351
        %v367 = vpack.c.b16 %v354, %v353
        %v368 = vpack.c.b16 %v356, %v355
        %v369 = vpack.c.b16 %v358, %v357
        %v370 = vpack.c.b16 %v360, %v359
        %v371 = vpack.c.b16 %v362, %v361
        %v372 = vpack.c.b16 %v364, %v363
        %381 = vmatprep.subr.bf16.mxu0 0
        %382 = vmatpush1.bf16.msra.mxu0 %v372
        %383 = vmatprep.subr.bf16.mxu0 0
        %384 = vmatpush1.bf16.msra.mxu0 %v371
        %385 = vmatprep.subr.bf16.mxu0 0
        %386 = vmatpush1.bf16.msra.mxu0 %v370
        %387 = vmatprep.subr.bf16.mxu0 0
        %388 = vmatpush1.bf16.msra.mxu0 %v369
        %389 = vmatprep.subr.bf16.mxu0 0
        %390 = vmatpush1.bf16.msra.mxu0 %v368
        %391 = vmatprep.subr.bf16.mxu0 0
        %392 = vmatpush1.bf16.msra.mxu0 %v367
        %393 = vmatprep.subr.bf16.mxu0 0
        %394 = vmatpush1.bf16.msra.mxu0 %v366
        %395 = vmatprep.subr.bf16.mxu0 0
        %396 = vmatpush1.bf16.msra.mxu0 %v365
        %397 = vmatprep.subr.bf16.mxu0 0
        %398 = vmatpush2.bf16.msra.mxu0 0
        %399 = vmatprep.subr.bf16.mxu0 0
        %400 = vmatpush2.bf16.msra.mxu0 0
        %401 = vmatprep.subr.bf16.mxu0 0
        %402 = vmatpush2.bf16.msra.mxu0 0
        %403 = vmatprep.subr.bf16.mxu0 0
        %404 = vmatpush2.bf16.msra.mxu0 0
        %405 = vmatprep.subr.bf16.mxu0 0
        %406 = vmatpush2.bf16.msra.mxu0 0
        %407 = vmatprep.subr.bf16.mxu0 0
        %408 = vmatpush2.bf16.msra.mxu0 0
        %409 = vmatprep.subr.bf16.mxu0 0
        %410 = vmatpush2.bf16.msra.mxu0 0
        %411 = vmatprep.subr.bf16.mxu0 0
        %412 = vmatpush2.bf16.msra.mxu0 0
        %413 = vmatprep.mubr.bf16.mxu0 0
        %414 = vmatmul.mubr.bf16.gmra.mxu0 %v279
        %v415 = vpop.f32.mrf.mxu0
        %v416 = vadd.f32 0.0, %v415
        %v417 = vpop.f32.mrf.mxu0
        %v418 = vpop.f32.mrf.mxu0
        %v419 = vadd.f32 0.0, %v418
        %v420 = vpop.f32.mrf.mxu0
        %421 = vdwg.mxu0
        %v438 = vunpack.c.l.b16 %v299
        %v439 = vunpack.c.l.b16 %v300
        %v440 = vunpack.c.l.b16 %v301
        %v441 = vunpack.c.l.b16 %v302
        %v442 = vunpack.c.l.b16 %v303
        %v443 = vunpack.c.l.b16 %v304
        %v444 = vunpack.c.l.b16 %v305
        %v445 = vunpack.c.l.b16 %v306
        %v446 = vunpack.c.l.b16 %v307
        %v447 = vunpack.c.l.b16 %v308
        %v448 = vunpack.c.l.b16 %v309
        %v449 = vunpack.c.l.b16 %v310
        %v450 = vunpack.c.l.b16 %v311
        %v451 = vunpack.c.l.b16 %v312
        %v452 = vunpack.c.l.b16 %v313
        %v453 = vunpack.c.l.b16 %v314
        %v454 = vpack.c.b16 %v439, %v438
        %v455 = vpack.c.b16 %v441, %v440
        %v456 = vpack.c.b16 %v443, %v442
        %v457 = vpack.c.b16 %v445, %v444
        %v458 = vpack.c.b16 %v447, %v446
        %v459 = vpack.c.b16 %v449, %v448
        %v460 = vpack.c.b16 %v451, %v450
        %v461 = vpack.c.b16 %v453, %v452
        %470 = vmatprep.subr.bf16.mxu0 0
        %471 = vmatpush1.bf16.msra.mxu0 %v461
        %472 = vmatprep.subr.bf16.mxu0 0
        %473 = vmatpush1.bf16.msra.mxu0 %v460
        %474 = vmatprep.subr.bf16.mxu0 0
        %475 = vmatpush1.bf16.msra.mxu0 %v459
        %476 = vmatprep.subr.bf16.mxu0 0
        %477 = vmatpush1.bf16.msra.mxu0 %v458
        %478 = vmatprep.subr.bf16.mxu0 0
        %479 = vmatpush1.bf16.msra.mxu0 %v457
        %480 = vmatprep.subr.bf16.mxu0 0
        %481 = vmatpush1.bf16.msra.mxu0 %v456
        %482 = vmatprep.subr.bf16.mxu0 0
        %483 = vmatpush1.bf16.msra.mxu0 %v455
        %484 = vmatprep.subr.bf16.mxu0 0
        %485 = vmatpush1.bf16.msra.mxu0 %v454
        %486 = vmatprep.subr.bf16.mxu0 0
        %487 = vmatpush2.bf16.msra.mxu0 0
        %488 = vmatprep.subr.bf16.mxu0 0
        %489 = vmatpush2.bf16.msra.mxu0 0
        %490 = vmatprep.subr.bf16.mxu0 0
        %491 = vmatpush2.bf16.msra.mxu0 0
        %492 = vmatprep.subr.bf16.mxu0 0
        %493 = vmatpush2.bf16.msra.mxu0 0
        %494 = vmatprep.subr.bf16.mxu0 0
        %495 = vmatpush2.bf16.msra.mxu0 0
        %496 = vmatprep.subr.bf16.mxu0 0
        %497 = vmatpush2.bf16.msra.mxu0 0
        %498 = vmatprep.subr.bf16.mxu0 0
        %499 = vmatpush2.bf16.msra.mxu0 0
        %500 = vmatprep.subr.bf16.mxu0 0
        %501 = vmatpush2.bf16.msra.mxu0 0
        %502 = vmatprep.mubr.bf16.mxu0 0
        %503 = vmatmul.mubr.bf16.gmra.mxu0 %v291
        %v504 = vpop.f32.mrf.mxu0
        %v505 = vadd.f32 %v416, %v504
        %v506 = vpop.f32.mrf.mxu0
        %v507 = vpop.f32.mrf.mxu0
        %v508 = vadd.f32 %v419, %v507
        %v509 = vpop.f32.mrf.mxu0
        %510 = vdwg.mxu0
        %s511 = scalar_lea.vmem [#allocation5], 128
        %v512 = vld [vmem:[%s511] sm:$0xf]
        %v513 = vld [vmem:[%s511 + $0x4] sm:$0xf]
        %v514 = vld [vmem:[%s511 + $0x8] sm:$0xf]
        %v515 = vld [vmem:[%s511 + $0xc] sm:$0xf]
        %v516 = vld [vmem:[%s511 + $0x10] sm:$0xf]
        %v517 = vld [vmem:[%s511 + $0x14] sm:$0xf]
        %v518 = vld [vmem:[%s511 + $0x18] sm:$0xf]
        %v519 = vld [vmem:[%s511 + $0x1c] sm:$0xf]
        %v520 = vld [vmem:[%s511 + $0x20] sm:$0xf]
        %v521 = vld [vmem:[%s511 + $0x24] sm:$0xf]
        %v522 = vld [vmem:[%s511 + $0x28] sm:$0xf]
        %v523 = vld [vmem:[%s511 + $0x2c] sm:$0xf]
        %v524 = vld [vmem:[%s511 + $0x30] sm:$0xf]
        %v525 = vld [vmem:[%s511 + $0x34] sm:$0xf]
        %v526 = vld [vmem:[%s511 + $0x38] sm:$0xf]
        %v527 = vld [vmem:[%s511 + $0x3c] sm:$0xf]
        %v544 = vunpack.c.l.b16 %v512
        %v545 = vunpack.c.l.b16 %v513
        %v546 = vunpack.c.l.b16 %v514
        %v547 = vunpack.c.l.b16 %v515
        %v548 = vunpack.c.l.b16 %v516
        %v549 = vunpack.c.l.b16 %v517
        %v550 = vunpack.c.l.b16 %v518
        %v551 = vunpack.c.l.b16 %v519
        %v552 = vunpack.c.l.b16 %v520
        %v553 = vunpack.c.l.b16 %v521
        %v554 = vunpack.c.l.b16 %v522
        %v555 = vunpack.c.l.b16 %v523
        %v556 = vunpack.c.l.b16 %v524
        %v557 = vunpack.c.l.b16 %v525
        %v558 = vunpack.c.l.b16 %v526
        %v559 = vunpack.c.l.b16 %v527
        %v560 = vpack.c.b16 %v545, %v544
        %v561 = vpack.c.b16 %v547, %v546
        %v562 = vpack.c.b16 %v549, %v548
        %v563 = vpack.c.b16 %v551, %v550
        %v564 = vpack.c.b16 %v553, %v552
        %v565 = vpack.c.b16 %v555, %v554
        %v566 = vpack.c.b16 %v557, %v556
        %v567 = vpack.c.b16 %v559, %v558
        %576 = vmatprep.subr.bf16.mxu0 0
        %577 = vmatpush1.bf16.msra.mxu0 %v567
        %578 = vmatprep.subr.bf16.mxu0 0
        %579 = vmatpush1.bf16.msra.mxu0 %v566
        %580 = vmatprep.subr.bf16.mxu0 0
        %581 = vmatpush1.bf16.msra.mxu0 %v565
        %582 = vmatprep.subr.bf16.mxu0 0
        %583 = vmatpush1.bf16.msra.mxu0 %v564
        %584 = vmatprep.subr.bf16.mxu0 0
        %585 = vmatpush1.bf16.msra.mxu0 %v563
        %586 = vmatprep.subr.bf16.mxu0 0
        %587 = vmatpush1.bf16.msra.mxu0 %v562
        %588 = vmatprep.subr.bf16.mxu0 0
        %589 = vmatpush1.bf16.msra.mxu0 %v561
        %590 = vmatprep.subr.bf16.mxu0 0
        %591 = vmatpush1.bf16.msra.mxu0 %v560
        %592 = vmatprep.subr.bf16.mxu0 0
        %593 = vmatpush2.bf16.msra.mxu0 0
        %594 = vmatprep.subr.bf16.mxu0 0
        %595 = vmatpush2.bf16.msra.mxu0 0
        %596 = vmatprep.subr.bf16.mxu0 0
        %597 = vmatpush2.bf16.msra.mxu0 0
        %598 = vmatprep.subr.bf16.mxu0 0
        %599 = vmatpush2.bf16.msra.mxu0 0
        %600 = vmatprep.subr.bf16.mxu0 0
        %601 = vmatpush2.bf16.msra.mxu0 0
        %602 = vmatprep.subr.bf16.mxu0 0
        %603 = vmatpush2.bf16.msra.mxu0 0
        %604 = vmatprep.subr.bf16.mxu0 0
        %605 = vmatpush2.bf16.msra.mxu0 0
        %606 = vmatprep.subr.bf16.mxu0 0
        %607 = vmatpush2.bf16.msra.mxu0 0
        %608 = vmatprep.mubr.bf16.mxu0 0
        %609 = vmatmul.mubr.bf16.gmra.mxu0 %v298
        %v610 = vpop.f32.mrf.mxu0
        %v611 = vadd.f32 0.0, %v610
        %v612 = vpop.f32.mrf.mxu0
        %v613 = vpop.f32.mrf.mxu0
        %v614 = vadd.f32 0.0, %v613
        %v615 = vpop.f32.mrf.mxu0
        %616 = vdwg.mxu0
        %v617 = vadd.f32 %v505, %v611
        %v618 = vadd.f32 %v508, %v614
        %v619 = vld [vmem:[%s2] sm:$0x1]
        %v621 = vlaneseq
        %v622 = vshrl.u32 %v621, 7
        %v623 = vsub.s32 0, %v622
        %v624 = vrot.slane %v619, %v623
        %v626 = vadd.f32 %v617, %v624
        %v627 = vadd.f32 %v618, %v624
        %v628 = vmax.f32 %v626, 0.0
        %v629 = vmax.f32 %v627, 0.0
        %v630 = vpack.c.bf16 %v629, %v628
        %v632 = vshrl.u32 %v630, 16
        %v634 = vrot.slane %v632, 7
        %v635 = vshll.u32 %v630, 16
        %v637 = vor.u32 %v634, %v635
        %v639 = vsel %vm290, 0, %v637
        %v640 = vrot.slane %v635, 1
        %v641 = vor.u32 %v632, %v640
        %v643 = vsel %vm297, %v641, 0
        %v644 = vld [vmem:[#allocation7] sm:$0xf]
        %v645 = vld [vmem:[#allocation7 + $0x4] sm:$0xf]
        %v646 = vld [vmem:[#allocation7 + $0x8] sm:$0xf]
        %v647 = vld [vmem:[#allocation7 + $0xc] sm:$0xf]
        %v648 = vld [vmem:[#allocation7 + $0x10] sm:$0xf]
        %v649 = vld [vmem:[#allocation7 + $0x14] sm:$0xf]
        %v650 = vld [vmem:[#allocation7 + $0x18] sm:$0xf]
        %v651 = vld [vmem:[#allocation7 + $0x1c] sm:$0xf]
        %v652 = vld [vmem:[#allocation7 + $0x20] sm:$0xf]
        %v653 = vld [vmem:[#allocation7 + $0x24] sm:$0xf]
        %v654 = vld [vmem:[#allocation7 + $0x28] sm:$0xf]
        %v655 = vld [vmem:[#allocation7 + $0x2c] sm:$0xf]
        %v656 = vld [vmem:[#allocation7 + $0x30] sm:$0xf]
        %v657 = vld [vmem:[#allocation7 + $0x34] sm:$0xf]
        %v658 = vld [vmem:[#allocation7 + $0x38] sm:$0xf]
        %v659 = vld [vmem:[#allocation7 + $0x3c] sm:$0xf]
        %s660 = scalar_lea.vmem [#allocation7], 64
        %v661 = vld [vmem:[%s660] sm:$0xf]
        %v662 = vld [vmem:[%s660 + $0x4] sm:$0xf]
        %v663 = vld [vmem:[%s660 + $0x8] sm:$0xf]
        %v664 = vld [vmem:[%s660 + $0xc] sm:$0xf]
        %v665 = vld [vmem:[%s660 + $0x10] sm:$0xf]
        %v666 = vld [vmem:[%s660 + $0x14] sm:$0xf]
        %v667 = vld [vmem:[%s660 + $0x18] sm:$0xf]
        %v668 = vld [vmem:[%s660 + $0x1c] sm:$0xf]
        %v669 = vld [vmem:[%s660 + $0x20] sm:$0xf]
        %v670 = vld [vmem:[%s660 + $0x24] sm:$0xf]
        %v671 = vld [vmem:[%s660 + $0x28] sm:$0xf]
        %v672 = vld [vmem:[%s660 + $0x2c] sm:$0xf]
        %v673 = vld [vmem:[%s660 + $0x30] sm:$0xf]
        %v674 = vld [vmem:[%s660 + $0x34] sm:$0xf]
        %v675 = vld [vmem:[%s660 + $0x38] sm:$0xf]
        %v676 = vld [vmem:[%s660 + $0x3c] sm:$0xf]
        %v693 = vunpack.c.l.b16 %v661
        %v694 = vunpack.c.l.b16 %v662
        %v695 = vunpack.c.l.b16 %v663
        %v696 = vunpack.c.l.b16 %v664
        %v697 = vunpack.c.l.b16 %v665
        %v698 = vunpack.c.l.b16 %v666
        %v699 = vunpack.c.l.b16 %v667
        %v700 = vunpack.c.l.b16 %v668
        %v701 = vunpack.c.l.b16 %v669
        %v702 = vunpack.c.l.b16 %v670
        %v703 = vunpack.c.l.b16 %v671
        %v704 = vunpack.c.l.b16 %v672
        %v705 = vunpack.c.l.b16 %v673
        %v706 = vunpack.c.l.b16 %v674
        %v707 = vunpack.c.l.b16 %v675
        %v708 = vunpack.c.l.b16 %v676
        %v709 = vpack.c.b16 %v694, %v693
        %v710 = vpack.c.b16 %v696, %v695
        %v711 = vpack.c.b16 %v698, %v697
        %v712 = vpack.c.b16 %v700, %v699
        %v713 = vpack.c.b16 %v702, %v701
        %v714 = vpack.c.b16 %v704, %v703
        %v715 = vpack.c.b16 %v706, %v705
        %v716 = vpack.c.b16 %v708, %v707
        %725 = vmatprep.subr.bf16.mxu0 0
        %726 = vmatpush1.bf16.msra.mxu0 %v716
        %727 = vmatprep.subr.bf16.mxu0 0
        %728 = vmatpush1.bf16.msra.mxu0 %v715
        %729 = vmatprep.subr.bf16.mxu0 0
        %730 = vmatpush1.bf16.msra.mxu0 %v714
        %731 = vmatprep.subr.bf16.mxu0 0
        %732 = vmatpush1.bf16.msra.mxu0 %v713
        %733 = vmatprep.subr.bf16.mxu0 0
        %734 = vmatpush1.bf16.msra.mxu0 %v712
        %735 = vmatprep.subr.bf16.mxu0 0
        %736 = vmatpush1.bf16.msra.mxu0 %v711
        %737 = vmatprep.subr.bf16.mxu0 0
        %738 = vmatpush1.bf16.msra.mxu0 %v710
        %739 = vmatprep.subr.bf16.mxu0 0
        %740 = vmatpush1.bf16.msra.mxu0 %v709
        %741 = vmatprep.subr.bf16.mxu0 0
        %742 = vmatpush2.bf16.msra.mxu0 0
        %743 = vmatprep.subr.bf16.mxu0 0
        %744 = vmatpush2.bf16.msra.mxu0 0
        %745 = vmatprep.subr.bf16.mxu0 0
        %746 = vmatpush2.bf16.msra.mxu0 0
        %747 = vmatprep.subr.bf16.mxu0 0
        %748 = vmatpush2.bf16.msra.mxu0 0
        %749 = vmatprep.subr.bf16.mxu0 0
        %750 = vmatpush2.bf16.msra.mxu0 0
        %751 = vmatprep.subr.bf16.mxu0 0
        %752 = vmatpush2.bf16.msra.mxu0 0
        %753 = vmatprep.subr.bf16.mxu0 0
        %754 = vmatpush2.bf16.msra.mxu0 0
        %755 = vmatprep.subr.bf16.mxu0 0
        %756 = vmatpush2.bf16.msra.mxu0 0
        %757 = vmatprep.mubr.bf16.mxu0 0
        %758 = vmatmul.mubr.bf16.gmra.mxu0 %v630
        %v759 = vpop.f32.mrf.mxu0
        %v760 = vadd.f32 0.0, %v759
        %v761 = vpop.f32.mrf.mxu0
        %v762 = vpop.f32.mrf.mxu0
        %v763 = vadd.f32 0.0, %v762
        %v764 = vpop.f32.mrf.mxu0
        %765 = vdwg.mxu0
        %v782 = vunpack.c.l.b16 %v644
        %v783 = vunpack.c.l.b16 %v645
        %v784 = vunpack.c.l.b16 %v646
        %v785 = vunpack.c.l.b16 %v647
        %v786 = vunpack.c.l.b16 %v648
        %v787 = vunpack.c.l.b16 %v649
        %v788 = vunpack.c.l.b16 %v650
        %v789 = vunpack.c.l.b16 %v651
        %v790 = vunpack.c.l.b16 %v652
        %v791 = vunpack.c.l.b16 %v653
        %v792 = vunpack.c.l.b16 %v654
        %v793 = vunpack.c.l.b16 %v655
        %v794 = vunpack.c.l.b16 %v656
        %v795 = vunpack.c.l.b16 %v657
        %v796 = vunpack.c.l.b16 %v658
        %v797 = vunpack.c.l.b16 %v659
        %v798 = vpack.c.b16 %v783, %v782
        %v799 = vpack.c.b16 %v785, %v784
        %v800 = vpack.c.b16 %v787, %v786
        %v801 = vpack.c.b16 %v789, %v788
        %v802 = vpack.c.b16 %v791, %v790
        %v803 = vpack.c.b16 %v793, %v792
        %v804 = vpack.c.b16 %v795, %v794
        %v805 = vpack.c.b16 %v797, %v796
        %814 = vmatprep.subr.bf16.mxu0 0
        %815 = vmatpush1.bf16.msra.mxu0 %v805
        %816 = vmatprep.subr.bf16.mxu0 0
        %817 = vmatpush1.bf16.msra.mxu0 %v804
        %818 = vmatprep.subr.bf16.mxu0 0
        %819 = vmatpush1.bf16.msra.mxu0 %v803
        %820 = vmatprep.subr.bf16.mxu0 0
        %821 = vmatpush1.bf16.msra.mxu0 %v802
        %822 = vmatprep.subr.bf16.mxu0 0
        %823 = vmatpush1.bf16.msra.mxu0 %v801
        %824 = vmatprep.subr.bf16.mxu0 0
        %825 = vmatpush1.bf16.msra.mxu0 %v800
        %826 = vmatprep.subr.bf16.mxu0 0
        %827 = vmatpush1.bf16.msra.mxu0 %v799
        %828 = vmatprep.subr.bf16.mxu0 0
        %829 = vmatpush1.bf16.msra.mxu0 %v798
        %830 = vmatprep.subr.bf16.mxu0 0
        %831 = vmatpush2.bf16.msra.mxu0 0
        %832 = vmatprep.subr.bf16.mxu0 0
        %833 = vmatpush2.bf16.msra.mxu0 0
        %834 = vmatprep.subr.bf16.mxu0 0
        %835 = vmatpush2.bf16.msra.mxu0 0
        %836 = vmatprep.subr.bf16.mxu0 0
        %837 = vmatpush2.bf16.msra.mxu0 0
        %838 = vmatprep.subr.bf16.mxu0 0
        %839 = vmatpush2.bf16.msra.mxu0 0
        %840 = vmatprep.subr.bf16.mxu0 0
        %841 = vmatpush2.bf16.msra.mxu0 0
        %842 = vmatprep.subr.bf16.mxu0 0
        %843 = vmatpush2.bf16.msra.mxu0 0
        %844 = vmatprep.subr.bf16.mxu0 0
        %845 = vmatpush2.bf16.msra.mxu0 0
        %846 = vmatprep.mubr.bf16.mxu0 0
        %847 = vmatmul.mubr.bf16.gmra.mxu0 %v639
        %v848 = vpop.f32.mrf.mxu0
        %v849 = vadd.f32 %v760, %v848
        %v850 = vpop.f32.mrf.mxu0
        %v851 = vpop.f32.mrf.mxu0
        %v852 = vadd.f32 %v763, %v851
        %v853 = vpop.f32.mrf.mxu0
        %854 = vdwg.mxu0
        %s855 = scalar_lea.vmem [#allocation7], 128
        %v856 = vld [vmem:[%s855] sm:$0xf]
        %v857 = vld [vmem:[%s855 + $0x4] sm:$0xf]
        %v858 = vld [vmem:[%s855 + $0x8] sm:$0xf]
        %v859 = vld [vmem:[%s855 + $0xc] sm:$0xf]
        %v860 = vld [vmem:[%s855 + $0x10] sm:$0xf]
        %v861 = vld [vmem:[%s855 + $0x14] sm:$0xf]
        %v862 = vld [vmem:[%s855 + $0x18] sm:$0xf]
        %v863 = vld [vmem:[%s855 + $0x1c] sm:$0xf]
        %v864 = vld [vmem:[%s855 + $0x20] sm:$0xf]
        %v865 = vld [vmem:[%s855 + $0x24] sm:$0xf]
        %v866 = vld [vmem:[%s855 + $0x28] sm:$0xf]
        %v867 = vld [vmem:[%s855 + $0x2c] sm:$0xf]
        %v868 = vld [vmem:[%s855 + $0x30] sm:$0xf]
        %v869 = vld [vmem:[%s855 + $0x34] sm:$0xf]
        %v870 = vld [vmem:[%s855 + $0x38] sm:$0xf]
        %v871 = vld [vmem:[%s855 + $0x3c] sm:$0xf]
        %v888 = vunpack.c.l.b16 %v856
        %v889 = vunpack.c.l.b16 %v857
        %v890 = vunpack.c.l.b16 %v858
        %v891 = vunpack.c.l.b16 %v859
        %v892 = vunpack.c.l.b16 %v860
        %v893 = vunpack.c.l.b16 %v861
        %v894 = vunpack.c.l.b16 %v862
        %v895 = vunpack.c.l.b16 %v863
        %v896 = vunpack.c.l.b16 %v864
        %v897 = vunpack.c.l.b16 %v865
        %v898 = vunpack.c.l.b16 %v866
        %v899 = vunpack.c.l.b16 %v867
        %v900 = vunpack.c.l.b16 %v868
        %v901 = vunpack.c.l.b16 %v869
        %v902 = vunpack.c.l.b16 %v870
        %v903 = vunpack.c.l.b16 %v871
        %v904 = vpack.c.b16 %v889, %v888
        %v905 = vpack.c.b16 %v891, %v890
        %v906 = vpack.c.b16 %v893, %v892
        %v907 = vpack.c.b16 %v895, %v894
        %v908 = vpack.c.b16 %v897, %v896
        %v909 = vpack.c.b16 %v899, %v898
        %v910 = vpack.c.b16 %v901, %v900
        %v911 = vpack.c.b16 %v903, %v902
        %920 = vmatprep.subr.bf16.mxu0 0
        %921 = vmatpush1.bf16.msra.mxu0 %v911
        %922 = vmatprep.subr.bf16.mxu0 0
        %923 = vmatpush1.bf16.msra.mxu0 %v910
        %924 = vmatprep.subr.bf16.mxu0 0
        %925 = vmatpush1.bf16.msra.mxu0 %v909
        %926 = vmatprep.subr.bf16.mxu0 0
        %927 = vmatpush1.bf16.msra.mxu0 %v908
        %928 = vmatprep.subr.bf16.mxu0 0
        %929 = vmatpush1.bf16.msra.mxu0 %v907
        %930 = vmatprep.subr.bf16.mxu0 0
        %931 = vmatpush1.bf16.msra.mxu0 %v906
        %932 = vmatprep.subr.bf16.mxu0 0
        %933 = vmatpush1.bf16.msra.mxu0 %v905
        %934 = vmatprep.subr.bf16.mxu0 0
        %935 = vmatpush1.bf16.msra.mxu0 %v904
        %936 = vmatprep.subr.bf16.mxu0 0
        %937 = vmatpush2.bf16.msra.mxu0 0
        %938 = vmatprep.subr.bf16.mxu0 0
        %939 = vmatpush2.bf16.msra.mxu0 0
        %940 = vmatprep.subr.bf16.mxu0 0
        %941 = vmatpush2.bf16.msra.mxu0 0
        %942 = vmatprep.subr.bf16.mxu0 0
        %943 = vmatpush2.bf16.msra.mxu0 0
        %944 = vmatprep.subr.bf16.mxu0 0
        %945 = vmatpush2.bf16.msra.mxu0 0
        %946 = vmatprep.subr.bf16.mxu0 0
        %947 = vmatpush2.bf16.msra.mxu0 0
        %948 = vmatprep.subr.bf16.mxu0 0
        %949 = vmatpush2.bf16.msra.mxu0 0
        %950 = vmatprep.subr.bf16.mxu0 0
        %951 = vmatpush2.bf16.msra.mxu0 0
        %952 = vmatprep.mubr.bf16.mxu0 0
        %953 = vmatmul.mubr.bf16.gmra.mxu0 %v643
        %v954 = vpop.f32.mrf.mxu0
        %v955 = vadd.f32 0.0, %v954
        %v956 = vpop.f32.mrf.mxu0
        %v957 = vpop.f32.mrf.mxu0
        %v958 = vadd.f32 0.0, %v957
        %v959 = vpop.f32.mrf.mxu0
        %960 = vdwg.mxu0
        %v961 = vadd.f32 %v849, %v955
        %v962 = vadd.f32 %v852, %v958
        %v963 = vld [vmem:[%s4] sm:$0x1]
        %v965 = vlaneseq
        %v966 = vshrl.u32 %v965, 7
        %v967 = vsub.s32 0, %v966
        %v968 = vrot.slane %v963, %v967
        %v970 = vadd.f32 %v961, %v968
        %v971 = vadd.f32 %v962, %v968
        %v972 = vunpack.c.l.bf16 %v273
        %v973 = vunpack.c.l.bf16 %v274
        %v974 = vadd.f32 %v970, %v972
        %v975 = vadd.f32 %v971, %v973
        %v976 = vmax.f32 %v974, 0.0
        %v977 = vmax.f32 %v975, 0.0
        %978 = vst [vmem:[%s271] sm:$0xff] %v976
        %979 = vst [vmem:[%s271 + $0x8] sm:$0xff] %v977
        %s980 = sand.u32 %s141, 1
        %s981 = scalar_lea.sflag [#allocation4], %s980
        %s982 = sand.u32 %s141, 1
        %s983 = smul.addr %s982, 16
        %s984 = scalar_lea.vmem [#allocation8], %s983
        // Predicated region
        $region53: #{tpu_custom_call.1} parent=39 // pred_check
          %p985 = pneg %p151
        $region54: #{tpu_custom_call.1} parent=39 // pred_check_branch
          %987 = sbr.rel (%p985) target = $region56
        $region55: #{tpu_custom_call.1} parent=39 // pred_region
          %s989 = ssub.s32 256, 256
          %990 = vsyncadd %s981, %s989
          %s991 = smul.addr %s23, 2
          %s992 = smul.addr %s991, 128
          %s993 = scalar_lea.hbm %s5, %s992
          %s994 = sshll.u32 %s984, 4
          %s995 = int_to_ptr.vmem [resolvable:$true] %s994
          %1000 = dma.vmem_to_hbm [thread:$0]  %s995, 256, %s993, %s981, 128, 128, 8
        $region56: #{tpu_custom_call.1} parent=39 // pred_fallthru
          _
      $region40: #{tpu_custom_call.1} parent=5 // pred_fallthru
        _
      %p1001 = scmp.le.s32.totalorder 2, %s18
      // Predicated region
      $region57: #{tpu_custom_call.1} parent=5 // pred_check
        %p1002 = pneg %p1001
      $region58: #{tpu_custom_call.1} parent=5 // pred_check_branch
        %1004 = sbr.rel (%p1002) target = $region60
      $region59: #{tpu_custom_call.1} parent=5 // pred_region
        %s1005 = ssub.s32 %s18, 2
        // Predicated region
        $region61: #{tpu_custom_call.1} parent=59 // pred_check
          %p1006 = pneg %p157
        $region62: #{tpu_custom_call.1} parent=59 // pred_check_branch
          %1008 = sbr.rel (%p1006) target = $region64
        $region63: #{tpu_custom_call.1} parent=59 // pred_region
          %s1009 = sand.u32 %s142, 1
          %s1010 = scalar_lea.sflag [#allocation4], %s1009
          %s1011 = sand.u32 %s142, 1
          %s1012 = smul.addr %s1011, 16
          %s1013 = scalar_lea.vmem [#allocation8], %s1012
          %1014 = dma.done %s1010, 256
        $region64: #{tpu_custom_call.1} parent=59 // pred_fallthru
          _
      $region60: #{tpu_custom_call.1} parent=5 // pred_fallthru
        _
    $region6: #{tpu_custom_call.1} parent=1 // loop_footer
      %s22 = sadd.s32 1, %s18
    $region7: #{tpu_custom_call.1} parent=1 // loop_footer_branch
      %17 = sbr.rel target = $region3
    $region8: #{tpu_custom_call.1} parent=1 // loop_exit
      _
    %1015 = vsyncpa [#allocation3], 1
    %s1016 = scalar_lea.sflag [#allocation3], 1
    %1017 = vsyncpa %s1016, 1
    %1018 = vsyncpa [#allocation6], 1
    %1019 = vsyncpa [#allocation4], 1
    %s1020 = scalar_lea.sflag [#allocation4], 1
    %1021 = vsyncpa %s1020, 1

</llo_original>
